<compile_context>
chip_gen: v7x
topology: tpu7x:2x2x1
jax: 0.10.0
libtpu: 0.0.40
codegen_flags: <defaults>
</compile_context>

<pallas_src>
import jax
import jax.numpy as jnp
from jax.experimental import pallas as pl
from jax.experimental.pallas import tpu as pltpu

INPUT_SIZE = 10
HIDDEN_SIZE = 20
OUTPUT_SIZE = 1

# Hidden dim on sublanes: pad 20 -> 32 (multiple of 8), not 128 lanes.
HIDDEN_PAD = 32

# Below this many rows, a standalone custom call costs more than the math.
SMALL_BATCH_BYPASS = 2048

_MAX_BLOCK_BATCH = 32768
_VMEM_LIMIT_FLOOR = 16 << 20
_VMEM_LIMIT_CAP = 48 << 20      # stays well under v7x's 64 MiB physical VMEM


def _cdiv(a, b):
    return -(-a // b)


def _round_up(a, b):
    return _cdiv(a, b) * b


def _default_block_batch():
    """Generation-dependent batch tile: per-tile HBM traffic should cover the
    ~0.35us per-grid-step pipeline overhead."""
    try:
        vmem_bytes = pltpu.get_tpu_info().vmem_capacity_bytes
    except Exception:
        return 8192
    if vmem_bytes <= 96 * 1024 * 1024:
        # v7x-class: 64 MiB VMEM but ~3.2 TB/s HBM -> needs bigger tiles.
        return 16384
    # v5e / v6e: 128 MiB VMEM, 0.8-1.4 TB/s HBM.
    return 8192


def _choose_tile(batch, block_batch):
    """Pick a batch tile (multiple of 128 when tiled) and nudge the tile count
    to an even number so v7x's two TensorCores stay balanced."""
    block_batch = max(128, min(block_batch, _MAX_BLOCK_BATCH))
    block_batch = (block_batch // 128) * 128
    if batch <= block_batch:
        return batch, 1
    tm = block_batch
    n = _cdiv(batch, tm)
    if n > 1 and n % 2 == 1:
        tm_even = _round_up(_cdiv(batch, n + 1), 128)
        if 0 < tm_even < batch:
            n_even = _cdiv(batch, tm_even)
            if n_even % 2 == 0:
                tm, n = tm_even, n_even
    return tm, n


def _vmem_limit_bytes(tm):
    x_bufs = 2 * tm * 128 * 4        # (tm, 10) lane-pads to (tm, 128), double-buffered
    out_bufs = 2 * 8 * tm * 4        # (1, tm) sublane-pads to (8, tm), double-buffered
    h_scratch = tm * HIDDEN_PAD * 4  # fc1 intermediate (HIDDEN_PAD, tm)
    need = x_bufs + out_bufs + h_scratch + (2 << 20)   # weights + compiler slack
    return int(min(max(need, _VMEM_LIMIT_FLOOR), _VMEM_LIMIT_CAP))


def mlp_kernel(x_ref, w1_ref, b1_ref, w2_ref, b2_ref, o_ref):
    # x_ref : (tm, INPUT_SIZE)           streamed activation tile
    # w1_ref: (HIDDEN_PAD, INPUT_SIZE)   resident (torch layout, zero-padded rows)
    # b1_ref: (HIDDEN_PAD, 1)            resident
    # w2_ref: (OUTPUT_SIZE, HIDDEN_PAD)  resident
    # b2_ref: (OUTPUT_SIZE, 1)           resident
    # o_ref : (OUTPUT_SIZE, tm)          lane-dense (transposed) output tile
    x = x_ref[...]
    # fc1 on the MXU, hidden on sublanes / batch on lanes:
    # (HIDDEN_PAD, in) x (tm, in), contracting `in` -> (HIDDEN_PAD, tm).
    h = jax.lax.dot_general(
        w1_ref[...], x,
        dimension_numbers=(((1,), (1,)), ((), ())),
        preferred_element_type=jnp.float32,
    )
    h = jnp.maximum(h + b1_ref[...], 0.0)                  # bias + ReLU (VPU)
    # fc2: (1, HIDDEN_PAD) @ (HIDDEN_PAD, tm) -> (1, tm).  Padded hidden rows
    # are exactly zero on both sides, so they contribute nothing.
    o = jnp.dot(w2_ref[...], h, preferred_element_type=jnp.float32)
    o_ref[...] = (o + b2_ref[...]).astype(o_ref.dtype)


def prepare_params(w1, b1, w2, b2):
    """One-time conversion from torch nn.Linear layout to kernel layout.

    w1: (hidden, in), b1: (hidden,), w2: (out, hidden), b2: (out,).
    Hidden dim zero-padded to HIDDEN_PAD on the sublane axis.
    """
    w1p = jnp.zeros((HIDDEN_PAD, INPUT_SIZE), jnp.float32)
    w1p = w1p.at[:HIDDEN_SIZE, :].set(w1.astype(jnp.float32))
    b1p = jnp.zeros((HIDDEN_PAD, 1), jnp.float32)
    b1p = b1p.at[:HIDDEN_SIZE, 0].set(b1.astype(jnp.float32))
    w2p = jnp.zeros((OUTPUT_SIZE, HIDDEN_PAD), jnp.float32)
    w2p = w2p.at[:, :HIDDEN_SIZE].set(w2.astype(jnp.float32))
    b2p = b2.reshape(OUTPUT_SIZE, 1).astype(jnp.float32)
    return w1p, b1p, w2p, b2p


def simple_mlp_forward(x, params, *, block_batch=None, use_kernel=None):
    """x: (B, INPUT_SIZE) f32; params from prepare_params().
    Returns (B, OUTPUT_SIZE), matching torch: relu(x @ W1^T + b1) @ W2^T + b2."""
    w1p, b1p, w2p, b2p = params
    B = x.shape[0]

    if use_kernel is None:
        use_kernel = B >= SMALL_BATCH_BYPASS
    if not use_kernel:
        # Small-batch bypass: dispatch overhead dwarfs the math; let XLA fuse it.
        h = jnp.maximum(x @ w1p.T + b1p[:, 0], 0.0)
        return h @ w2p.T + b2p[:, 0]

    if block_batch is None:
        block_batch = _default_block_batch()
    tm, n_tiles = _choose_tile(B, block_batch)
    grid = (n_tiles,)

    flops = 2 * B * (INPUT_SIZE * HIDDEN_SIZE + HIDDEN_SIZE * OUTPUT_SIZE)
    bytes_accessed = 4 * (x.size + w1p.size + b1p.size + w2p.size
                          + b2p.size + B * OUTPUT_SIZE)

    out_t = pl.pallas_call(
        mlp_kernel,
        out_shape=jax.ShapeDtypeStruct((OUTPUT_SIZE, B), x.dtype),
        grid=grid,
        in_specs=[
            pl.BlockSpec((tm, INPUT_SIZE), lambda i: (i, 0)),            # x tile
            pl.BlockSpec((HIDDEN_PAD, INPUT_SIZE), lambda i: (0, 0)),    # w1 resident
            pl.BlockSpec((HIDDEN_PAD, 1), lambda i: (0, 0)),             # b1 resident
            pl.BlockSpec((OUTPUT_SIZE, HIDDEN_PAD), lambda i: (0, 0)),   # w2 resident
            pl.BlockSpec((OUTPUT_SIZE, 1), lambda i: (0, 0)),            # b2 resident
        ],
        out_specs=pl.BlockSpec((OUTPUT_SIZE, tm), lambda i: (0, i)),     # lane-dense
        compiler_params=pltpu.CompilerParams(
            dimension_semantics=("parallel",),       # 2x on v7x's two TensorCores
            vmem_limit_bytes=_vmem_limit_bytes(tm),
        ),
        cost_estimate=pl.CostEstimate(
            flops=flops, transcendentals=0, bytes_accessed=bytes_accessed),
    )(x, w1p, b1p, w2p, b2p)

    # (OUTPUT_SIZE, B) -> (B, OUTPUT_SIZE) to match the torch module's output.
    return jnp.transpose(out_t)


def init_params(key):
    """Same shapes/init convention as the PyTorch module (torch layout)."""
    k1, k2, k3, k4 = jax.random.split(key, 4)
    bound1 = 1.0 / jnp.sqrt(jnp.float32(INPUT_SIZE))
    bound2 = 1.0 / jnp.sqrt(jnp.float32(HIDDEN_SIZE))
    w1 = jax.random.uniform(k1, (HIDDEN_SIZE, INPUT_SIZE), jnp.float32, -bound1, bound1)
    b1 = jax.random.uniform(k2, (HIDDEN_SIZE,), jnp.float32, -bound1, bound1)
    w2 = jax.random.uniform(k3, (OUTPUT_SIZE, HIDDEN_SIZE), jnp.float32, -bound2, bound2)
    b2 = jax.random.uniform(k4, (OUTPUT_SIZE,), jnp.float32, -bound2, bound2)
    return w1, b1, w2, b2


def _reference(x, w1, b1, w2, b2):
    return jnp.maximum(x @ w1.T + b1, 0.0) @ w2.T + b2


if __name__ == "__main__":
    key = jax.random.PRNGKey(0)
    kx, kp = jax.random.split(key)

    w1, b1, w2, b2 = init_params(kp)
    params = prepare_params(w1, b1, w2, b2)   # one-time layout/padding prep

    # 1) Small batch per the module spec -- forced through the Pallas kernel.
    batch = 8
    x = jax.random.normal(kx, (batch, INPUT_SIZE), jnp.float32)
    y = simple_mlp_forward(x, params, use_kernel=True)
    jax.block_until_ready(y)
    ref = _reference(x, w1, b1, w2, b2)
    assert y.shape == (batch, OUTPUT_SIZE)
    assert jnp.allclose(y, ref, atol=1e-5, rtol=1e-5)

    # 2) Multi-tile grid: even tile count (v7x TC balance) + partial last tile.
    xb = jax.random.normal(jax.random.PRNGKey(1), (1280, INPUT_SIZE), jnp.float32)
    yb = simple_mlp_forward(xb, params, block_batch=512, use_kernel=True)
    jax.block_until_ready(yb)
    refb = _reference(xb, w1, b1, w2, b2)
    assert yb.shape == (1280, OUTPUT_SIZE)
    assert jnp.allclose(yb, refb, atol=1e-4, rtol=1e-4)

    # 3) Small-batch bypass path (no custom call) -- same numerics.
    yc = simple_mlp_forward(x, params)
    jax.block_until_ready(yc)
    assert jnp.allclose(yc, ref, atol=1e-5, rtol=1e-5)

    print("KERNEL_OK")
</pallas_src>

<mosaic_0001>
module attributes {stable_mosaic.version = 11 : i64} {
  func.func @mlp_kernel(%arg0: i32, %arg1: memref<8x10xf32, #tpu.memory_space<vmem>>, %arg2: memref<32x10xf32, #tpu.memory_space<vmem>>, %arg3: memref<32x1xf32, #tpu.memory_space<vmem>>, %arg4: memref<1x32xf32, #tpu.memory_space<vmem>>, %arg5: memref<1x1xf32, #tpu.memory_space<vmem>>, %arg6: memref<1x8xf32, #tpu.memory_space<vmem>>) attributes {dimension_semantics = [#tpu.dimension_semantics<parallel>], iteration_bounds = array<i64: 1>, scalar_prefetch = 0 : i64, scratch_operands = 0 : i64, tpu.core_type = #tpu.core_type<tc>, window_params = [{transform_indices = @transform_0, window_bounds = array<i64: 8, 10>}, {pipeline_mode = #tpu.pipeline_mode<synchronous>, transform_indices = @transform_1, window_bounds = array<i64: 32, 10>}, {pipeline_mode = #tpu.pipeline_mode<synchronous>, transform_indices = @transform_2, window_bounds = array<i64: 32, 1>}, {pipeline_mode = #tpu.pipeline_mode<synchronous>, transform_indices = @transform_3, window_bounds = array<i64: 1, 32>}, {pipeline_mode = #tpu.pipeline_mode<synchronous>, transform_indices = @transform_4, window_bounds = array<i64: 1, 1>}, {transform_indices = @transform_5, window_bounds = array<i64: 1, 8>}]} {
    %c0 = arith.constant 0 : index
    %c0_0 = arith.constant 0 : index
    %0 = vector.load %arg1[%c0, %c0_0] : memref<8x10xf32, #tpu.memory_space<vmem>>, vector<8x10xf32>
    %c0_1 = arith.constant 0 : index
    %c0_2 = arith.constant 0 : index
    %1 = vector.load %arg2[%c0_1, %c0_2] : memref<32x10xf32, #tpu.memory_space<vmem>>, vector<32x10xf32>
    %cst = arith.constant dense<0.000000e+00> : vector<32x8xf32>
    %2 = tpu.matmul %1, %0, %cst {dimension_numbers = #tpu.dot_dimension_numbers<[1], [1], [0], [0], [0, 0, 1, 0], [], []>} : vector<32x10xf32>, vector<8x10xf32>, vector<32x8xf32> -> vector<32x8xf32>
    %c0_3 = arith.constant 0 : index
    %c0_4 = arith.constant 0 : index
    %3 = vector.load %arg3[%c0_3, %c0_4] : memref<32x1xf32, #tpu.memory_space<vmem>>, vector<32x1xf32>
    %4 = vector.broadcast %3 : vector<32x1xf32> to vector<32x8xf32>
    %5 = arith.addf %2, %4 : vector<32x8xf32>
    %cst_5 = arith.constant 0.000000e+00 : f32
    %6 = vector.broadcast %cst_5 : f32 to vector<32x8xf32>
    %7 = arith.maximumf %5, %6 : vector<32x8xf32>
    %c0_6 = arith.constant 0 : index
    %c0_7 = arith.constant 0 : index
    %8 = vector.load %arg4[%c0_6, %c0_7] : memref<1x32xf32, #tpu.memory_space<vmem>>, vector<1x32xf32>
    %cst_8 = arith.constant dense<0.000000e+00> : vector<1x8xf32>
    %9 = tpu.matmul %8, %7, %cst_8 {dimension_numbers = #tpu.dot_dimension_numbers<[1], [0], [0], [1], [0, 0, 1, 1], [], []>} : vector<1x32xf32>, vector<32x8xf32>, vector<1x8xf32> -> vector<1x8xf32>
    %c0_9 = arith.constant 0 : index
    %c0_10 = arith.constant 0 : index
    %10 = vector.load %arg5[%c0_9, %c0_10] : memref<1x1xf32, #tpu.memory_space<vmem>>, vector<1x1xf32>
    %11 = vector.broadcast %10 : vector<1x1xf32> to vector<1x8xf32>
    %12 = arith.addf %9, %11 : vector<1x8xf32>
    %c0_11 = arith.constant 0 : index
    %c0_12 = arith.constant 0 : index
    %13 = vector.load %arg6[%c0_11, %c0_12] : memref<1x8xf32, #tpu.memory_space<vmem>>, vector<1x8xf32>
    tpu.vector_store %arg6[%c0_11, %c0_12], %12 {strides = array<i32>} : memref<1x8xf32, #tpu.memory_space<vmem>>, vector<1x8xf32>,
    return
  }
  func.func @transform_0(%arg0: i32) -> (i32, i32) {
    %c0_i32 = arith.constant 0 : i32
    %c0_i32_0 = arith.constant 0 : i32
    return %arg0, %c0_i32 : i32, i32
  }
  func.func @transform_1(%arg0: i32) -> (i32, i32) {
    %c0_i32 = arith.constant 0 : i32
    %c0_i32_0 = arith.constant 0 : i32
    %c0_i32_1 = arith.constant 0 : i32
    return %c0_i32, %c0_i32_0 : i32, i32
  }
  func.func @transform_2(%arg0: i32) -> (i32, i32) {
    %c0_i32 = arith.constant 0 : i32
    %c0_i32_0 = arith.constant 0 : i32
    %c0_i32_1 = arith.constant 0 : i32
    return %c0_i32, %c0_i32_0 : i32, i32
  }
  func.func @transform_3(%arg0: i32) -> (i32, i32) {
    %c0_i32 = arith.constant 0 : i32
    %c0_i32_0 = arith.constant 0 : i32
    %c0_i32_1 = arith.constant 0 : i32
    return %c0_i32, %c0_i32_0 : i32, i32
  }
  func.func @transform_4(%arg0: i32) -> (i32, i32) {
    %c0_i32 = arith.constant 0 : i32
    %c0_i32_0 = arith.constant 0 : i32
    %c0_i32_1 = arith.constant 0 : i32
    return %c0_i32, %c0_i32_0 : i32, i32
  }
  func.func @transform_5(%arg0: i32) -> (i32, i32) {
    %c0_i32 = arith.constant 0 : i32
    %c0_i32_0 = arith.constant 0 : i32
    return %c0_i32, %arg0 : i32, i32
  }
}

</mosaic_0001>

<llo_original>
// kernel: tpu_custom_call.1
$region0: #{tpu_custom_call.1}
  #allocation0 [shape = 'u32[]', space=smem, size = 0x4, offset = 0x4, fixed_abs, tag = 'smem constant byte address 0x4 - core index']
  #allocation1 [shape = 'u32[144,128]{1,0:T(1,128)}', space=vmem, size = 0x12000, scoped, tag = 'internal scratch']
  #allocation2 [shape = 'f32[1,1]{1,0:T(1,128)S(1)}', space=vmem, size = 0x200, scoped, tag = 'scoped memory for tpu_custom_call.1']
  %s0 = inlined_call_operand.vmem [shape: f32[8,10], index: 0, kind: input, shape index: {}]
  %s1 = inlined_call_operand.vmem [shape: f32[32,10], index: 1, kind: input, shape index: {}]
  %s2 = inlined_call_operand.vmem [shape: f32[32,1], index: 2, kind: input, shape index: {}]
  %s3 = inlined_call_operand.vmem [shape: f32[1,32], index: 3, kind: input, shape index: {}]
  %s4 = inlined_call_operand.<no memory space> [shape: f32[1,1], index: 4, kind: input, shape index: {}]
  %s5 = inlined_call_operand.hbm [shape: f32[1,8], index: 5, kind: output, shape index: {}]
  %s6 = sld [smem:[#allocation0]]
  $region30: #{tpu_custom_call.1} parent=0
    _
  %s8 = ssub.s32 1, %s6
  %s9 = scalar_select 0, %s8, %s6
  %v10 = vstv %s4
  %11 = vst [vmem:[#allocation2] sm:$0x1] %v10
  $region1: #{tpu_custom_call.1} parent=0
    #allocation3 [shape = 'u8[512]{0}', space=vmem, size = 0x400, scoped, tag = 'output window, operand 0, single buffered']
    #allocation4 [shape = 's32[1]{0}', space=sflag, size = 0x4, scoped, tag = 'scoped memory for tpu_custom_call.1']
    %12 = vsyncpa [#allocation4], 0
    // Predicated region
    $region2: #{tpu_custom_call.1} parent=1 // pred_check
      _
    $region3: #{tpu_custom_call.1} parent=1 // pred_check_branch
      %14 = sbr.rel (0) target = $region5
    $region4: #{tpu_custom_call.1} parent=1 // pred_region
      _
    $region5: #{tpu_custom_call.1} parent=1 // pred_fallthru
      _
    // Predicated region
    $region6: #{tpu_custom_call.1} parent=1 // pred_check
      _
    $region7: #{tpu_custom_call.1} parent=1 // pred_check_branch
      %16 = sbr.rel (0) target = $region9
    $region8: #{tpu_custom_call.1} parent=1 // pred_region
      _
    $region9: #{tpu_custom_call.1} parent=1 // pred_fallthru
      _
    // Predicated region
    $region10: #{tpu_custom_call.1} parent=1 // pred_check
      _
    $region11: #{tpu_custom_call.1} parent=1 // pred_check_branch
      %18 = sbr.rel (0) target = $region13
    $region12: #{tpu_custom_call.1} parent=1 // pred_region
      _
    $region13: #{tpu_custom_call.1} parent=1 // pred_fallthru
      _
    // Predicated region
    $region14: #{tpu_custom_call.1} parent=1 // pred_check
      _
    $region15: #{tpu_custom_call.1} parent=1 // pred_check_branch
      %20 = sbr.rel (0) target = $region17
    $region16: #{tpu_custom_call.1} parent=1 // pred_region
      _
    $region17: #{tpu_custom_call.1} parent=1 // pred_fallthru
      _
    // Predicated region
    $region18: #{tpu_custom_call.1} parent=1 // pred_check
      _
    $region19: #{tpu_custom_call.1} parent=1 // pred_check_branch
      %22 = sbr.rel (0) target = $region21
    $region20: #{tpu_custom_call.1} parent=1 // pred_region
      _
    $region21: #{tpu_custom_call.1} parent=1 // pred_fallthru
      _
    %v23 = vld [vmem:[%s0] sm:$0xff]
    %v24 = vld [vmem:[%s1] sm:$0xff]
    %v25 = vld [vmem:[%s1 + $0x8] sm:$0xff]
    %v26 = vld [vmem:[%s1 + $0x10] sm:$0xff]
    %v27 = vld [vmem:[%s1 + $0x18] sm:$0xff]
    %v28 = vld [vmem:[%s2] sm:$0xff]
    %v29 = vld [vmem:[%s2 + $0x8] sm:$0xff]
    %v30 = vld [vmem:[%s2 + $0x10] sm:$0xff]
    %v31 = vld [vmem:[%s2 + $0x18] sm:$0xff]
    %33 = vset.pattern.permute.xlu0 0
    %34 = vperm.xlu0 %33, %v28
    %v35 = vpop.permute.xlu0 %34
    %38 = vset.pattern.permute.xlu0 0
    %39 = vperm.xlu0 %38, %v29
    %v40 = vpop.permute.xlu0 %39
    %43 = vset.pattern.permute.xlu0 0
    %44 = vperm.xlu0 %43, %v30
    %v45 = vpop.permute.xlu0 %44
    %48 = vset.pattern.permute.xlu0 0
    %49 = vperm.xlu0 %48, %v31
    %v50 = vpop.permute.xlu0 %49
    %vm52 = vcmask 80896
    %v54 = vsel %vm52, %v24, 0
    %v57 = vsel %vm52, %v25, 0
    %v60 = vsel %vm52, %v26, 0
    %v63 = vsel %vm52, %v27, 0
    %v66 = vsel %vm52, %v23, 0
    %68 = vmatprep.subr.mxu0 0.0
    %69 = vmatpush1.xpose.msra.mxu0 %v66
    %70 = vmatprep.subr.mxu0 0.0
    %71 = vmatpush1.xpose.msra.mxu0 0.0
    %72 = vmatprep.subr.mxu0 0.0
    %73 = vmatpush1.xpose.msra.mxu0 0.0
    %74 = vmatprep.subr.mxu0 0.0
    %75 = vmatpush1.xpose.msra.mxu0 0.0
    %76 = vmatprep.subr.mxu0 0.0
    %77 = vmatpush1.xpose.msra.mxu0 0.0
    %78 = vmatprep.subr.mxu0 0.0
    %79 = vmatpush1.xpose.msra.mxu0 0.0
    %80 = vmatprep.subr.mxu0 0.0
    %81 = vmatpush1.xpose.msra.mxu0 0.0
    %82 = vmatprep.subr.mxu0 0.0
    %83 = vmatpush1.xpose.msra.mxu0 0.0
    %84 = vmatprep.subr.mxu0 0.0
    %85 = vmatpush1.xpose.msra.mxu0 0.0
    %86 = vmatprep.subr.mxu0 0.0
    %87 = vmatpush1.xpose.msra.mxu0 0.0
    %88 = vmatprep.subr.mxu0 0.0
    %89 = vmatpush1.xpose.msra.mxu0 0.0
    %90 = vmatprep.subr.mxu0 0.0
    %91 = vmatpush1.xpose.msra.mxu0 0.0
    %92 = vmatprep.subr.mxu0 0.0
    %93 = vmatpush1.xpose.msra.mxu0 0.0
    %94 = vmatprep.subr.mxu0 0.0
    %95 = vmatpush1.xpose.msra.mxu0 0.0
    %96 = vmatprep.subr.mxu0 0.0
    %97 = vmatpush1.xpose.msra.mxu0 0.0
    %98 = vmatprep.subr.mxu0 0.0
    %99 = vmatpush1.xpose.msra.mxu0 0.0
    %100 = vmatprep.subr.mxu0 0.0
    %101 = vmatpush1.xpose.msra.mxu0 0.0
    %102 = vmatprep.subr.mxu0 0.0
    %103 = vmatpush1.xpose.msra.mxu0 0.0
    %104 = vmatprep.subr.mxu0 0.0
    %105 = vmatpush1.xpose.msra.mxu0 0.0
    %106 = vmatprep.subr.mxu0 0.0
    %107 = vmatpush1.xpose.msra.mxu0 0.0
    %108 = vmatprep.subr.mxu0 0.0
    %109 = vmatpush1.xpose.msra.mxu0 0.0
    %110 = vmatprep.subr.mxu0 0.0
    %111 = vmatpush1.xpose.msra.mxu0 0.0
    %112 = vmatprep.subr.mxu0 0.0
    %113 = vmatpush1.xpose.msra.mxu0 0.0
    %114 = vmatprep.subr.mxu0 0.0
    %115 = vmatpush1.xpose.msra.mxu0 0.0
    %116 = vmatprep.subr.mxu0 0.0
    %117 = vmatpush1.xpose.msra.mxu0 0.0
    %118 = vmatprep.subr.mxu0 0.0
    %119 = vmatpush1.xpose.msra.mxu0 0.0
    %120 = vmatprep.subr.mxu0 0.0
    %121 = vmatpush1.xpose.msra.mxu0 0.0
    %122 = vmatprep.subr.mxu0 0.0
    %123 = vmatpush1.xpose.msra.mxu0 0.0
    %124 = vmatprep.subr.mxu0 0.0
    %125 = vmatpush1.xpose.msra.mxu0 0.0
    %126 = vmatprep.subr.mxu0 0.0
    %127 = vmatpush1.xpose.msra.mxu0 0.0
    %128 = vmatprep.subr.mxu0 0.0
    %129 = vmatpush1.xpose.msra.mxu0 0.0
    %130 = vmatprep.subr.mxu0 0.0
    %131 = vmatpush1.xpose.msra.mxu0 0.0
    %132 = vmatprep.mubr.f32.mxu0 0.0
    %133 = vmatmul.mubr.f32.gmra.mrb[0].mxu0 %v54
    %v134 = vpop.f32.mrb[0].mxu0
    %v135 = vadd.f32 %v35, %v134
    %v136 = vpop.f32.mrb[0].mxu0
    %137 = vmatprep.mubr.f32.mxu0 0.0
    %138 = vmatmul.mubr.f32.gmra.mrb[0].mxu0 %v57
    %v139 = vpop.f32.mrb[0].mxu0
    %v140 = vadd.f32 %v40, %v139
    %v141 = vpop.f32.mrb[0].mxu0
    %142 = vmatprep.mubr.f32.mxu0 0.0
    %143 = vmatmul.mubr.f32.gmra.mrb[0].mxu0 %v60
    %v144 = vpop.f32.mrb[0].mxu0
    %v145 = vadd.f32 %v45, %v144
    %v146 = vpop.f32.mrb[0].mxu0
    %147 = vmatprep.mubr.f32.mxu0 0.0
    %148 = vmatmul.mubr.f32.gmra.mrb[0].mxu0 %v63
    %v149 = vpop.f32.mrb[0].mxu0
    %v150 = vadd.f32 %v50, %v149
    %v151 = vpop.f32.mrb[0].mxu0
    %152 = vdwg.mxu0
    %v153 = vmax.f32 %v135, 0.0
    %v154 = vmax.f32 %v140, 0.0
    %v155 = vmax.f32 %v145, 0.0
    %v156 = vmax.f32 %v150, 0.0
    %v157 = vld [vmem:[%s3] sm:$0x1]
    %v158 = vld [vmem:[#allocation2] sm:$0x1]
    %160 = vset.pattern.permute.xlu0 0
    %161 = vperm.xlu0 %160, %v158
    %v162 = vpop.permute.xlu0 %161
    %v164 = vlaneseq
    %v165 = vshrl.u32 %v164, 7
    %v166 = vsub.s32 0, %v165
    %v167 = vrot.slane %v162, %v166
    %vm168 = vcmask 261120
    %v170 = vsel %vm168, %v157, 0
    %172 = vmatprep.subr.mxu0 0.0
    %173 = vmatpush1.msra.mxu0 %v153
    %174 = vmatprep.subr.mxu0 0.0
    %175 = vmatpush1.msra.mxu0 %v154
    %176 = vmatprep.subr.mxu0 0.0
    %177 = vmatpush1.msra.mxu0 %v155
    %178 = vmatprep.subr.mxu0 0.0
    %179 = vmatpush1.msra.mxu0 %v156
    %180 = vmatprep.subr.mxu0 0.0
    %181 = vmatpush1.msra.mxu0 0.0
    %182 = vmatprep.subr.mxu0 0.0
    %183 = vmatpush1.msra.mxu0 0.0
    %184 = vmatprep.subr.mxu0 0.0
    %185 = vmatpush1.msra.mxu0 0.0
    %186 = vmatprep.subr.mxu0 0.0
    %187 = vmatpush1.msra.mxu0 0.0
    %188 = vmatprep.subr.mxu0 0.0
    %189 = vmatpush1.msra.mxu0 0.0
    %190 = vmatprep.subr.mxu0 0.0
    %191 = vmatpush1.msra.mxu0 0.0
    %192 = vmatprep.subr.mxu0 0.0
    %193 = vmatpush1.msra.mxu0 0.0
    %194 = vmatprep.subr.mxu0 0.0
    %195 = vmatpush1.msra.mxu0 0.0
    %196 = vmatprep.subr.mxu0 0.0
    %197 = vmatpush1.msra.mxu0 0.0
    %198 = vmatprep.subr.mxu0 0.0
    %199 = vmatpush1.msra.mxu0 0.0
    %200 = vmatprep.subr.mxu0 0.0
    %201 = vmatpush1.msra.mxu0 0.0
    %202 = vmatprep.subr.mxu0 0.0
    %203 = vmatpush1.msra.mxu0 0.0
    %204 = vmatprep.subr.mxu0 0.0
    %205 = vmatpush1.msra.mxu0 0.0
    %206 = vmatprep.subr.mxu0 0.0
    %207 = vmatpush1.msra.mxu0 0.0
    %208 = vmatprep.subr.mxu0 0.0
    %209 = vmatpush1.msra.mxu0 0.0
    %210 = vmatprep.subr.mxu0 0.0
    %211 = vmatpush1.msra.mxu0 0.0
    %212 = vmatprep.subr.mxu0 0.0
    %213 = vmatpush1.msra.mxu0 0.0
    %214 = vmatprep.subr.mxu0 0.0
    %215 = vmatpush1.msra.mxu0 0.0
    %216 = vmatprep.subr.mxu0 0.0
    %217 = vmatpush1.msra.mxu0 0.0
    %218 = vmatprep.subr.mxu0 0.0
    %219 = vmatpush1.msra.mxu0 0.0
    %220 = vmatprep.subr.mxu0 0.0
    %221 = vmatpush1.msra.mxu0 0.0
    %222 = vmatprep.subr.mxu0 0.0
    %223 = vmatpush1.msra.mxu0 0.0
    %224 = vmatprep.subr.mxu0 0.0
    %225 = vmatpush1.msra.mxu0 0.0
    %226 = vmatprep.subr.mxu0 0.0
    %227 = vmatpush1.msra.mxu0 0.0
    %228 = vmatprep.subr.mxu0 0.0
    %229 = vmatpush1.msra.mxu0 0.0
    %230 = vmatprep.subr.mxu0 0.0
    %231 = vmatpush1.msra.mxu0 0.0
    %232 = vmatprep.subr.mxu0 0.0
    %233 = vmatpush1.msra.mxu0 0.0
    %234 = vmatprep.subr.mxu0 0.0
    %235 = vmatpush1.msra.mxu0 0.0
    %236 = vmatprep.mubr.f32.mxu0 0.0
    %237 = vmatmul.mubr.f32.gmra.mrb[0].mxu0 %v170
    %v238 = vpop.f32.mrb[0].mxu0
    %v239 = vadd.f32 %v167, %v238
    %v240 = vpop.f32.mrb[0].mxu0
    %241 = vdwg.mxu0
    %vm242 = vcmask 57344
    %243 = vst.msk [vmem:[#allocation3] sm:$0x1] %vm242, %v239
    // Predicated region
    $region22: #{tpu_custom_call.1} parent=1 // pred_check
      _
    $region23: #{tpu_custom_call.1} parent=1 // pred_check_branch
      %245 = sbr.rel (0) target = $region25
    $region24: #{tpu_custom_call.1} parent=1 // pred_region
      %s247 = ssub.s32 16, 16
      %248 = vsyncadd [#allocation4], %s247
      %s250 = sshll.u32 [#allocation3], 4
      %s251 = int_to_ptr.vmem [resolvable:$true] %s250
      %253 = dma.vmem_to_hbm [thread:$0]  %s251, 16, %s5, [#allocation4]
    $region25: #{tpu_custom_call.1} parent=1 // pred_fallthru
      _
    // Predicated region
    $region26: #{tpu_custom_call.1} parent=1 // pred_check
      _
    $region27: #{tpu_custom_call.1} parent=1 // pred_check_branch
      %255 = sbr.rel (0) target = $region29
    $region28: #{tpu_custom_call.1} parent=1 // pred_region
      %256 = dma.done [#allocation4], 16
    $region29: #{tpu_custom_call.1} parent=1 // pred_fallthru
      _
    %257 = vsyncpa [#allocation4], 1

</llo_original>
